<compile_context>
chip_gen: v5e
topology: v5e:2x2
jax: 0.10.0
libtpu: 0.0.40
codegen_flags: <defaults>
</compile_context>

<pallas_src>
import functools

import jax
import jax.numpy as jnp
from jax import lax
from jax.experimental import pallas as pl
from jax.experimental.pallas import tpu as pltpu

LANES = 128
# ~4 MiB per input block per pipeline buffer: 2 inputs x 2 buffers = 16 MiB
# for f32 -> well under every generation's VMEM once vmem_limit_bytes is set.
TARGET_BLOCK_BYTES = 4 * 1024 * 1024
ACC_ROWS = 8  # one f32 vreg


def _make_kernel(rows, blk, num_tiles, tiles_per_core, needs_mask, acc_rows):
    folds = blk // acc_rows

    def accumulate(mu_ref, var_ref, acc_ref, masked):
        mu = mu_ref[...].astype(jnp.float32)
        var = var_ref[...].astype(jnp.float32)
        if masked:
            # Overhang rows get mu=0, var=1  ->  0^2 + 1 - log(1) - 1 == 0.
            # NOTE: mask is applied BEFORE the log so uninitialized boundary
            # data never reaches it.
            base = (num_tiles - 1) * blk  # masked branch only runs on the last tile
            row_ids = base + lax.broadcasted_iota(jnp.int32, (blk, LANES), 0)
            valid = row_ids < rows
            mu = jnp.where(valid, mu, 0.0)
            var = jnp.where(valid, var, 1.0)
        contrib = mu * mu + var - jnp.log(var) - 1.0          # (blk, LANES) f32
        if folds > 1:
            # vreg-aligned fold: reduce to a single (8,128) vreg so only one
            # vreg is loaded/stored into the accumulator per grid step.
            contrib = contrib.reshape(folds, acc_rows, LANES).sum(axis=0)
        acc_ref[...] += contrib

    def kernel(mu_ref, var_ref, out_ref, acc_ref):
        c = pl.program_id(0)   # core / partial-sum axis
        i = pl.program_id(1)   # reduction axis ("arbitrary")

        @pl.when(i == 0)
        def _():
            acc_ref[...] = jnp.zeros_like(acc_ref)

        if needs_mask:
            g = c * tiles_per_core + i

            # Hot path: interior tiles, zero mask work.
            @pl.when(g < num_tiles - 1)
            def _():
                accumulate(mu_ref, var_ref, acc_ref, masked=False)

            # Cold path: the single boundary tile.
            @pl.when(g == num_tiles - 1)
            def _():
                accumulate(mu_ref, var_ref, acc_ref, masked=True)

            # g >= num_tiles (duplicated clamped tile from the core split):
            # contributes nothing -> skip accumulation entirely.
        else:
            accumulate(mu_ref, var_ref, acc_ref, masked=False)

        @pl.when(i == tiles_per_core - 1)
        def _():
            out_ref[0, 0] = jnp.sum(acc_ref[...])

    return kernel


@functools.partial(jax.jit, static_argnames=("block_rows", "num_cores", "buffers"))
def minus_d_kl_loss(mu, var, *, block_rows=None, num_cores=1, buffers=2):
    """Pallas TPU version of MinusD_KLLoss.forward(mu, var) -> scalar f32.

    num_cores: set to 2 on v7x (dual-TensorCore) to shard the tile axis with
               CORE_PARALLEL semantics; keep 1 on single-TC v5e/v6e.
    buffers:   pipeline depth for the two input streams (default 2).
    """
    assert mu.shape == var.shape, "mu and var must have the same shape"
    n = mu.size

    mu_flat = jnp.reshape(mu, (-1,))
    var_flat = jnp.reshape(var, (-1,))

    # Lane remainder (< 128 elements): plain JAX, negligible work.
    rem = n % LANES
    if rem:
        mu_t = mu_flat[n - rem:].astype(jnp.float32)
        var_t = var_flat[n - rem:].astype(jnp.float32)
        tail = jnp.sum(mu_t * mu_t + var_t - jnp.log(var_t) - 1.0)
        mu_flat = mu_flat[: n - rem]
        var_flat = var_flat[: n - rem]
    else:
        tail = jnp.float32(0.0)

    rows = (n - rem) // LANES
    if rows == 0:
        return 0.5 * tail

    # Contiguous reshape (no HBM copy); dtype untouched (kernel upcasts in-register).
    mu2d = jnp.reshape(mu_flat, (rows, LANES))
    var2d = jnp.reshape(var_flat, (rows, LANES))

    itemsize = jnp.dtype(mu.dtype).itemsize
    # Packed-sublane granularity: 8 rows for 32-bit, 16 for 16-bit, 32 for 8-bit.
    sub = 8 * max(1, 4 // max(1, itemsize))

    if block_rows is None:
        target = max(sub, TARGET_BLOCK_BYTES // (LANES * itemsize))
    else:
        target = int(block_rows)
    blk = min(target, rows)
    if blk < rows:
        blk = max(sub, (blk // sub) * sub)  # (8,128) rule + dense packed sublanes

    num_tiles = pl.cdiv(rows, blk)
    n_split = max(1, min(int(num_cores), num_tiles))
    tiles_per_core = pl.cdiv(num_tiles, n_split)
    needs_clamp = n_split * tiles_per_core != num_tiles
    needs_mask = (rows % blk != 0) or needs_clamp

    acc_rows = ACC_ROWS if blk % ACC_ROWS == 0 else blk

    if needs_clamp:
        # Clamp so duplicated (fully-skipped) tiles still map to a valid block.
        def in_map(c, i):
            return (jnp.minimum(c * tiles_per_core + i, num_tiles - 1), 0)
    else:
        def in_map(c, i):
            return (c * tiles_per_core + i, 0)

    spec_kwargs = {}
    if int(buffers) != 2:
        spec_kwargs["pipeline_mode"] = pl.Buffered(int(buffers))
    in_specs = [
        pl.BlockSpec((blk, LANES), in_map, **spec_kwargs),
        pl.BlockSpec((blk, LANES), in_map, **spec_kwargs),
    ]

    kernel = _make_kernel(rows, blk, num_tiles, tiles_per_core, needs_mask, acc_rows)

    # Explicit VMEM budget sized to the real footprint (2 inputs x pipeline
    # buffers x block + accumulator) with headroom; covers v5e's 16 MiB
    # scoped default while staying well under v7x's 64 MiB physical.
    in_block_bytes = blk * LANES * itemsize
    vmem_needed = 2 * max(2, int(buffers)) * in_block_bytes + acc_rows * LANES * 4
    vmem_limit = int(min(max(vmem_needed + (4 << 20), 32 << 20), 48 << 20))

    # TODO(synk): on v7x, verify with xprof that CORE_PARALLEL actually lands
    # the leading axis on both TensorCores; fall back to pl.core_map otherwise.
    dim_sem = (pltpu.CORE_PARALLEL if n_split > 1 else "arbitrary", "arbitrary")

    partials = pl.pallas_call(
        kernel,
        out_shape=jax.ShapeDtypeStruct((n_split, 1), jnp.float32),
        grid_spec=pltpu.PrefetchScalarGridSpec(
            num_scalar_prefetch=0,
            grid=(n_split, tiles_per_core),
            in_specs=in_specs,
            out_specs=pl.BlockSpec((1, 1), lambda c, i: (c, 0),
                                   memory_space=pltpu.SMEM),
            scratch_shapes=[pltpu.VMEM((acc_rows, LANES), jnp.float32)],
        ),
        compiler_params=pltpu.CompilerParams(
            dimension_semantics=dim_sem,
            vmem_limit_bytes=vmem_limit,
        ),
        cost_estimate=pl.CostEstimate(
            flops=5 * rows * LANES,
            transcendentals=rows * LANES,
            bytes_accessed=2 * rows * LANES * itemsize + 4 * n_split,
        ),
    )(mu2d, var2d)

    return 0.5 * (jnp.sum(partials) + tail)


def _reference(mu, var):
    mu = mu.astype(jnp.float32)
    var = var.astype(jnp.float32)
    return 0.5 * (
        jnp.sum(mu**2) + jnp.sum(var) - jnp.sum(jnp.log(var)) - var.size
    )


if __name__ == "__main__":
    key = jax.random.PRNGKey(0)

    def make_inputs(k, shape, dtype=jnp.float32):
        k_mu, k_var = jax.random.split(k)
        mu = jax.random.normal(k_mu, shape, dtype=jnp.float32)
        # var must be positive for log(var)
        var = jax.nn.softplus(jax.random.normal(k_var, shape, dtype=jnp.float32)) + 1e-3
        return mu.astype(dtype), var.astype(dtype)

    # (shape, dtype, block_rows override) — exercising the single full-extent
    # tile path, the lane-remainder tail path, the multi-tile cold-path mask,
    # and a bf16 case hitting the 16-row packed-sublane block rounding.
    cases = [
        ((2, 4, 16, 16), jnp.float32, None),
        ((3, 5, 7, 11), jnp.float32, None),
        ((1, 1, 40, 128), jnp.float32, 16),
        ((1, 2, 48, 128), jnp.bfloat16, 40),
    ]
    keys = jax.random.split(key, len(cases))
    for k, (shape, dt, br) in zip(keys, cases):
        mu, var = make_inputs(k, shape, dt)
        if br is None:
            out = minus_d_kl_loss(mu, var)
        else:
            out = minus_d_kl_loss(mu, var, block_rows=br)
        out = jax.block_until_ready(out)
        ref = _reference(mu, var)
        assert jnp.allclose(out, ref, rtol=2e-4, atol=1e-2), (shape, dt, out, ref)

    print("KERNEL_OK")
</pallas_src>

<mosaic_0001>
module attributes {stable_mosaic.version = 11 : i64} {
  func.func @kernel(%arg0: i32, %arg1: i32, %arg2: memref<16x128xf32, #tpu.memory_space<vmem>>, %arg3: memref<16x128xf32, #tpu.memory_space<vmem>>, %arg4: memref<1x1xf32, #tpu.memory_space<smem>>, %arg5: memref<8x128xf32, #tpu.memory_space<vmem>>) attributes {dimension_semantics = [#tpu.dimension_semantics<arbitrary>, #tpu.dimension_semantics<arbitrary>], iteration_bounds = array<i64: 1, 1>, scalar_prefetch = 0 : i64, scratch_operands = 1 : i64, tpu.core_type = #tpu.core_type<tc>, window_params = [{transform_indices = @transform_0, window_bounds = array<i64: 16, 128>}, {transform_indices = @transform_1, window_bounds = array<i64: 16, 128>}, {transform_indices = @transform_2, window_bounds = array<i64: 1, 1>}]} {
    %c0_i32 = arith.constant 0 : i32
    %0 = arith.cmpi eq, %arg1, %c0_i32 : i32
    %1 = arith.extui %0 : i1 to i32
    %c0_i32_0 = arith.constant 0 : i32
    %2 = arith.cmpi ne, %1, %c0_i32_0 : i32
    scf.if %2 {
      %cst_11 = arith.constant 0.000000e+00 : f32
      %19 = vector.broadcast %cst_11 : f32 to vector<8x128xf32>
      %c0_12 = arith.constant 0 : index
      %c0_13 = arith.constant 0 : index
      %20 = vector.load %arg5[%c0_12, %c0_13] : memref<8x128xf32, #tpu.memory_space<vmem>>, vector<8x128xf32>
      tpu.vector_store %arg5[%c0_12, %c0_13], %19 {strides = array<i32>} : memref<8x128xf32, #tpu.memory_space<vmem>>, vector<8x128xf32>,
    } else {
    }
    %c0 = arith.constant 0 : index
    %c0_1 = arith.constant 0 : index
    %3 = vector.load %arg2[%c0, %c0_1] : memref<16x128xf32, #tpu.memory_space<vmem>>, vector<16x128xf32>
    %c0_2 = arith.constant 0 : index
    %c0_3 = arith.constant 0 : index
    %4 = vector.load %arg3[%c0_2, %c0_3] : memref<16x128xf32, #tpu.memory_space<vmem>>, vector<16x128xf32>
    %5 = arith.mulf %3, %3 : vector<16x128xf32>
    %6 = arith.addf %5, %4 : vector<16x128xf32>
    %7 = math.log %4 : vector<16x128xf32>
    %8 = arith.subf %6, %7 : vector<16x128xf32>
    %cst = arith.constant 1.000000e+00 : f32
    %9 = vector.broadcast %cst : f32 to vector<16x128xf32>
    %10 = arith.subf %8, %9 : vector<16x128xf32>
    %11 = vector.shape_cast %10 : vector<16x128xf32> to vector<2x8x128xf32>
    %cst_4 = arith.constant dense<0.000000e+00> : vector<8x128xf32>
    %12 = vector.multi_reduction <add>, %11, %cst_4 [0] : vector<2x8x128xf32> to vector<8x128xf32>
    %c0_5 = arith.constant 0 : index
    %c0_6 = arith.constant 0 : index
    %13 = vector.load %arg5[%c0_5, %c0_6] : memref<8x128xf32, #tpu.memory_space<vmem>>, vector<8x128xf32>
    %14 = arith.addf %13, %12 : vector<8x128xf32>
    %c0_7 = arith.constant 0 : index
    %c0_8 = arith.constant 0 : index
    %15 = vector.load %arg5[%c0_7, %c0_8] : memref<8x128xf32, #tpu.memory_space<vmem>>, vector<8x128xf32>
    tpu.vector_store %arg5[%c0_7, %c0_8], %14 {strides = array<i32>} : memref<8x128xf32, #tpu.memory_space<vmem>>, vector<8x128xf32>,
    %c0_i32_9 = arith.constant 0 : i32
    %16 = arith.cmpi eq, %arg1, %c0_i32_9 : i32
    %17 = arith.extui %16 : i1 to i32
    %c0_i32_10 = arith.constant 0 : i32
    %18 = arith.cmpi ne, %17, %c0_i32_10 : i32
    scf.if %18 {
      %c0_11 = arith.constant 0 : index
      %c0_12 = arith.constant 0 : index
      %19 = vector.load %arg5[%c0_11, %c0_12] : memref<8x128xf32, #tpu.memory_space<vmem>>, vector<8x128xf32>
      %20 = vector.shape_cast %19 : vector<8x128xf32> to vector<1x8x128xf32>
      %cst_13 = arith.constant dense<0.000000e+00> : vector<1xf32>
      %21 = vector.multi_reduction <add>, %20, %cst_13 [1, 2] : vector<1x8x128xf32> to vector<1xf32>
      %22 = vector.shape_cast %21 : vector<1xf32> to vector<1x1x1xf32>
      %23 = vector.extract %22[0, 0, 0] : f32 from vector<1x1x1xf32>
      %c0_14 = arith.constant 0 : index
      %c0_15 = arith.constant 0 : index
      %24 = memref.load %arg4[%c0_14, %c0_15] : memref<1x1xf32, #tpu.memory_space<smem>>
      memref.store %23, %arg4[%c0_14, %c0_15] : memref<1x1xf32, #tpu.memory_space<smem>>
    } else {
    }
    return
  }
  func.func @transform_0(%arg0: i32, %arg1: i32) -> (i32, i32) {
    %c1_i32 = arith.constant 1 : i32
    %0 = arith.muli %arg0, %c1_i32 : i32
    %1 = arith.addi %0, %arg1 : i32
    %c0_i32 = arith.constant 0 : i32
    %c0_i32_0 = arith.constant 0 : i32
    return %1, %c0_i32 : i32, i32
  }
  func.func @transform_1(%arg0: i32, %arg1: i32) -> (i32, i32) {
    %c1_i32 = arith.constant 1 : i32
    %0 = arith.muli %arg0, %c1_i32 : i32
    %1 = arith.addi %0, %arg1 : i32
    %c0_i32 = arith.constant 0 : i32
    %c0_i32_0 = arith.constant 0 : i32
    return %1, %c0_i32 : i32, i32
  }
  func.func @transform_2(%arg0: i32, %arg1: i32) -> (i32, i32) {
    %c0_i32 = arith.constant 0 : i32
    %c0_i32_0 = arith.constant 0 : i32
    return %arg0, %c0_i32 : i32, i32
  }
}

</mosaic_0001>

<llo_original>
// kernel: minus_d_kl_loss.1
$region0: #{minus_d_kl_loss.1}
  #allocation0 [shape = 'u32[]', space=smem, size = 0x4, offset = 0x4, fixed_abs, tag = 'smem constant byte address 0x4 - core index']
  #allocation1 [shape = 'u32[72,128]{1,0:T(1,128)}', space=vmem, size = 0x9000, scoped, tag = 'internal scratch']
  #allocation2 [shape = 'f32[8,128]{1,0:T(8,128)}', space=vmem, size = 0x1000, scoped, tag = 'scratch operand']
  %s0 = inlined_call_operand.vmem [shape: f32[16,128], index: 0, kind: input, shape index: {}]
  %s1 = inlined_call_operand.vmem [shape: f32[16,128], index: 1, kind: input, shape index: {}]
  %s2 = inlined_call_operand.hbm [shape: f32[1,1], index: 2, kind: output, shape index: {}]
  %s3 = sld [smem:[#allocation0]]
  $region26: #{minus_d_kl_loss.1} parent=0
    _
  %s5 = ssub.s32 1, %s3
  %s6 = scalar_select 0, %s5, %s3
  $region1: #{minus_d_kl_loss.1} parent=0
    #allocation3 [shape = 'u8[512]{0}', space=smem, size = 0x200, scoped, tag = 'output window, operand 0, single buffered']
    #allocation4 [shape = 's32[1]{0}', space=sflag, size = 0x4, scoped, tag = 'scoped memory for minus_d_kl_loss.1']
    %7 = vsyncpa [#allocation4], 0
    // Predicated region
    $region2: #{minus_d_kl_loss.1} parent=1 // pred_check
      _
    $region3: #{minus_d_kl_loss.1} parent=1 // pred_check_branch
      %9 = sbr.rel (0) target = $region5
    $region4: #{minus_d_kl_loss.1} parent=1 // pred_region
      %s10 = sadd.s32 0, 0
      %s11 = smul.u32 2, %s10
      %p12 = scmp.lt.s32.totalorder %s11, 1
      %s13 = scalar_select %p12, %s11, 1
      %s14 = smul.addr %s13, 8
      %s15 = scalar_lea.vmem %s0, %s14
      %s16 = sadd.s32 0, 0
      %s17 = smul.u32 2, %s16
    $region5: #{minus_d_kl_loss.1} parent=1 // pred_fallthru
      _
    // Predicated region
    $region6: #{minus_d_kl_loss.1} parent=1 // pred_check
      _
    $region7: #{minus_d_kl_loss.1} parent=1 // pred_check_branch
      %19 = sbr.rel (0) target = $region9
    $region8: #{minus_d_kl_loss.1} parent=1 // pred_region
      %s20 = sadd.s32 0, 0
      %s21 = smul.u32 2, %s20
      %p22 = scmp.lt.s32.totalorder %s21, 1
      %s23 = scalar_select %p22, %s21, 1
      %s24 = smul.addr %s23, 8
      %s25 = scalar_lea.vmem %s1, %s24
      %s26 = sadd.s32 0, 0
      %s27 = smul.u32 2, %s26
    $region9: #{minus_d_kl_loss.1} parent=1 // pred_fallthru
      _
    %s28 = sadd.s32 0, 0
    %s29 = smul.u32 2, %s28
    %p30 = scmp.lt.s32.totalorder %s29, 1
    %s31 = scalar_select %p30, %s29, 1
    %s32 = smul.addr %s31, 8
    %s33 = scalar_lea.vmem %s0, %s32
    %s34 = sadd.s32 0, 0
    %s35 = smul.u32 2, %s34
    %p36 = scmp.lt.s32.totalorder %s35, 1
    %s37 = scalar_select %p36, %s35, 1
    %s38 = smul.addr %s37, 8
    %s39 = scalar_lea.vmem %s1, %s38
    %s40 = sadd.s32 0, 0
    %s41 = smul.u32 2, %s40
    %p42 = scmp.lt.s32.totalorder %s41, 1
    %s43 = scalar_select %p42, %s41, 1
    %s44 = smul.addr %s43, 8
    %s45 = scalar_lea.vmem %s0, %s44
    %s46 = sadd.s32 0, 0
    %s47 = smul.u32 2, %s46
    %s48 = sadd.s32 0, 0
    %s49 = smul.u32 2, %s48
    %p50 = scmp.lt.s32.totalorder %s49, 1
    %s51 = scalar_select %p50, %s49, 1
    %s52 = smul.addr %s51, 8
    %s53 = scalar_lea.vmem %s1, %s52
    %s54 = sadd.s32 0, 0
    %s55 = smul.u32 2, %s54
    %p56 = scmp.eq.s32.totalorder 0, 0
    // Predicated region
    $region10: #{minus_d_kl_loss.1} parent=1 // pred_check
      %p57 = pneg %p56
    $region11: #{minus_d_kl_loss.1} parent=1 // pred_check_branch
      %59 = sbr.rel (%p57) target = $region13
    $region12: #{minus_d_kl_loss.1} parent=1 // pred_region
      %60 = vst [vmem:[#allocation2] sm:$0xff] 0.0
    $region13: #{minus_d_kl_loss.1} parent=1 // pred_fallthru
      _
    %v61 = vld [vmem:[%s45] sm:$0xff]
    %v62 = vld [vmem:[%s45 + $0x8] sm:$0xff]
    %v63 = vld [vmem:[%s53] sm:$0xff]
    %v64 = vld [vmem:[%s53 + $0x8] sm:$0xff]
    %v65 = vmul.f32 %v61, %v61
    %v66 = vmul.f32 %v62, %v62
    %v67 = vadd.f32 %v65, %v63
    %v68 = vadd.f32 %v66, %v64
    %v69 = vlog2.pop %v63
    %v70 = vmul.f32 %v69, 0.6931472
    %v71 = vlog2.pop %v64
    %v72 = vmul.f32 %v71, 0.6931472
    %v73 = vsub.f32 %v67, %v70
    %v74 = vsub.f32 %v68, %v72
    %v75 = vsub.f32 %v73, 1.0
    %v76 = vsub.f32 %v74, 1.0
    %v77 = vadd.f32 %v75, %v76
    %v78 = vld [vmem:[#allocation2] sm:$0xff]
    %v79 = vadd.f32 %v78, %v77
    %80 = vst [vmem:[#allocation2] sm:$0xff] %v79
    // Predicated region
    $region14: #{minus_d_kl_loss.1} parent=1 // pred_check
      %p81 = pneg %p56
    $region15: #{minus_d_kl_loss.1} parent=1 // pred_check_branch
      %83 = sbr.rel (%p81) target = $region17
    $region16: #{minus_d_kl_loss.1} parent=1 // pred_region
      %v84 = vld [vmem:[#allocation2] sm:$0xff]
      %85 = vadd.xlane.f32.xlu0 %v84
      %v86 = vpop.xlane.xlu0 %85
      %v87 = vrot.slane %v86, 4
      %v88 = vadd.f32 %v86, %v87
      %v89 = vrot.slane %v88, 2
      %v90 = vadd.f32 %v88, %v89
      %v91 = vrot.slane %v90, 1
      %v92 = vadd.f32 %v90, %v91
      %s93 = vtos %v92
      %s94 = scalar_lea.smem [#allocation3], 0
      %95 = sst [smem:[%s94]] %s93
    $region17: #{minus_d_kl_loss.1} parent=1 // pred_fallthru
      _
    // Predicated region
    $region18: #{minus_d_kl_loss.1} parent=1 // pred_check
      _
    $region19: #{minus_d_kl_loss.1} parent=1 // pred_check_branch
      %97 = sbr.rel (0) target = $region21
    $region20: #{minus_d_kl_loss.1} parent=1 // pred_region
      %99 = vsyncadd [#allocation4], 0
      %s101 = sshll.u32 %s2, 4
      %s102 = int_to_ptr.hbm [resolvable:$true] %s101
      %104 = dma.smem_to_hbm [#allocation3], 16, %s102, [#allocation4]
    $region21: #{minus_d_kl_loss.1} parent=1 // pred_fallthru
      _
    // Predicated region
    $region22: #{minus_d_kl_loss.1} parent=1 // pred_check
      _
    $region23: #{minus_d_kl_loss.1} parent=1 // pred_check_branch
      %106 = sbr.rel (0) target = $region25
    $region24: #{minus_d_kl_loss.1} parent=1 // pred_region
      %108 = dma.done [#allocation4], 16
    $region25: #{minus_d_kl_loss.1} parent=1 // pred_fallthru
      _
    %109 = sfence
    %110 = vsyncpa [#allocation4], 1

</llo_original>
